<compile_context>
chip_gen: v7x
topology: tpu7x:2x2x1
jax: 0.10.0
libtpu: 0.0.40
codegen_flags: <defaults>
</compile_context>

<pallas_src>
import functools

import jax
import jax.numpy as jnp
from jax import lax
from jax.experimental import pallas as pl
from jax.experimental.pallas import tpu as pltpu


B = 2                   # example batch
R, C = 40, 2            # rc coordinates 40x2
F = R * C               # 80 real (flattened) features
K_PAD = 128             # contraction ("in") axis padded to native lane width
N_PAD = 128             # output ("out") axis padded to native lane width
BIAS_LANE = F           # x[:, 80] == 1.0 carries the bias through the matmul
DROP_P = 0.1
KEEP_SCALE = 1.0 / (1.0 - DROP_P)
EPS = 1e-12
# keep an element iff hash >= p * 2^32  (P(keep) = 1 - p)
_DROP_THRESH = int(DROP_P * (1 << 32)) & 0xFFFFFFFF
MAX_TILE_B = 256        # batch rows per grid step when batching many samples


def _empty_kernel(seed_ref, x_ref, wt_ref, o_ref, *, tile_b):
    """seed_ref: SMEM (1,) int32 (scalar prefetch)
    x_ref : (tile_b, 128) f32 -- lanes 0..79 real features, lane 80 == 1.0, rest 0
    wt_ref: (128, 128)    f32 -- (K=in, N=out) layout; row 80 holds the bias
    o_ref : (tile_b, 128) f32"""
    x = x_ref[...]

    col = lax.broadcasted_iota(jnp.int32, x.shape, 1)
    valid = col < F                     # real feature lanes only
    even = (col & 1) == 0

    # --- F.normalize(x, p=2, dim=1, eps=1e-12) on the (B, 40, 2) view -------
    # flattened feature j = r*2 + c, so the dim=1 norm groups are exactly the
    # even / odd columns of the flattened view.
    x2 = jnp.where(valid, x * x, 0.0)
    s_total = jnp.sum(x2, axis=1, keepdims=True)                        # (tb, 1)
    s_even = jnp.sum(jnp.where(even, x2, 0.0), axis=1, keepdims=True)   # (tb, 1)
    s_odd = s_total - s_even
    # 1 / max(sqrt(s), eps) == rsqrt(max(s, eps^2)); rsqrt runs on the EUP.
    inv_even = lax.rsqrt(jnp.maximum(s_even, EPS * EPS))
    inv_odd = lax.rsqrt(jnp.maximum(s_odd, EPS * EPS))
    # inverted-dropout scale 1/(1-p) folded into the normalization factor;
    # the bias lane and padding pass through unscaled (multiplier 1.0).
    inv = jnp.where(valid, jnp.where(even, inv_even, inv_odd) * KEEP_SCALE, 1.0)

    # --- Dropout(p=0.1), training mode ---------------------------------------
    # Counter-based uint32 hash RNG (plain VPU integer ops; runs on hardware
    # and under interpret mode). Absolute row offset keeps masks unique across
    # batch grid blocks. Bias / pad lanes are never dropped.
    row = lax.broadcasted_iota(jnp.int32, x.shape, 0)
    row_abs = pl.program_id(0) * tile_b + row
    idx = (row_abs * K_PAD + col).astype(jnp.uint32)
    h = idx + seed_ref[0].astype(jnp.uint32)
    h = (h ^ (h >> 16)) * jnp.uint32(0x7FEB352D)
    h = (h ^ (h >> 15)) * jnp.uint32(0x846CA68B)
    h = h ^ (h >> 16)
    keep = (h >= jnp.uint32(_DROP_THRESH)) | jnp.logical_not(valid)
    xd = jnp.where(keep, x * inv, 0.0)

    # --- Linear(80, 80): plain (M,K)x(K,N) MXU matmul; bias rides in row 80 --
    o_ref[...] = lax.dot_general(
        xd, wt_ref[...],
        dimension_numbers=(((1,), (0,)), ((), ())),
        preferred_element_type=jnp.float32)                             # (tb, 128)


def prepare_params(w, b):
    """One-time packing (outside jit): PyTorch-layout (out=80, in=80) weight ->
    transposed (K=128, N=128) tile with the bias folded into row BIAS_LANE.
    Pad rows/columns stay zero so the sliced-away output lanes remain finite."""
    wt = jnp.zeros((K_PAD, N_PAD), jnp.float32)
    wt = wt.at[:F, :F].set(w.T)
    wt = wt.at[BIAS_LANE, :F].set(b)
    return wt


@jax.jit
def empty_forward(x, wt_pad, seed):
    """x: (bsz, 40, 2) f32; wt_pad: (128, 128) f32; seed: int32 scalar."""
    bsz = x.shape[0]
    x_flat = x.reshape(bsz, F)                       # glue: flatten(start_dim=1)

    # batch tiling: one block at small bsz, 256-row blocks (parallel across
    # v7x TensorCores) when batching many samples
    tile_b = bsz if bsz <= MAX_TILE_B else MAX_TILE_B
    num_blocks = pl.cdiv(bsz, tile_b)
    bsz_pad = num_blocks * tile_b

    # glue: pad K to 128 for lane-dense unmasked loads; lane 80 = 1.0 (bias)
    x_pad = jnp.zeros((bsz_pad, K_PAD), jnp.float32)
    x_pad = x_pad.at[:bsz, :F].set(x_flat)
    x_pad = x_pad.at[:bsz, BIAS_LANE].set(1.0)

    seed_arr = jnp.asarray([seed], dtype=jnp.int32)

    out_pad = pl.pallas_call(
        functools.partial(_empty_kernel, tile_b=tile_b),
        out_shape=jax.ShapeDtypeStruct((bsz_pad, N_PAD), jnp.float32),
        grid_spec=pltpu.PrefetchScalarGridSpec(
            num_scalar_prefetch=1,
            grid=(num_blocks,),
            in_specs=[
                pl.BlockSpec((tile_b, K_PAD), lambda i, s: (i, 0)),   # x block
                pl.BlockSpec((K_PAD, N_PAD), lambda i, s: (0, 0)),    # W_t (resident)
            ],
            out_specs=pl.BlockSpec((tile_b, N_PAD), lambda i, s: (i, 0)),
        ),
        compiler_params=pltpu.CompilerParams(
            dimension_semantics=("parallel",)),
    )(seed_arr, x_pad, wt_pad)

    # glue: drop batch/lane padding, unflatten(1, (40, 2)), squeeze
    return jnp.squeeze(out_pad[:bsz, :F].reshape(bsz, R, C))


if __name__ == "__main__":
    key = jax.random.PRNGKey(0)
    kx, kw, kb = jax.random.split(key, 3)

    # deterministic parameters matching nn.Linear(80, 80):
    # W: (out=80, in=80), b: (80,), uniform(-1/sqrt(in), 1/sqrt(in))
    bound = 1.0 / jnp.sqrt(jnp.float32(F))
    w = jax.random.uniform(kw, (F, F), jnp.float32, -bound, bound)
    b = jax.random.uniform(kb, (F,), jnp.float32, -bound, bound)

    # input: rc coordinates (B, 40, 2)
    x = jax.random.normal(kx, (B, R, C), jnp.float32)

    wt_pad = prepare_params(w, b)          # one-time param packing (outside jit)
    out = empty_forward(x, wt_pad, 1234)
    jax.block_until_ready(out)

    assert out.shape == (B, R, C), out.shape
    assert out.dtype == jnp.float32
    assert bool(jnp.all(jnp.isfinite(out)))
    print("KERNEL_OK")
</pallas_src>

<mosaic_0001>
module attributes {stable_mosaic.version = 11 : i64} {
  func.func @_empty_kernel(%arg0: i32, %arg1: memref<1xi32, #tpu.memory_space<smem>>, %arg2: memref<2x128xf32, #tpu.memory_space<vmem>>, %arg3: memref<128x128xf32, #tpu.memory_space<vmem>>, %arg4: memref<2x128xf32, #tpu.memory_space<vmem>>) attributes {dimension_semantics = [#tpu.dimension_semantics<parallel>], iteration_bounds = array<i64: 1>, scalar_prefetch = 1 : i64, scratch_operands = 0 : i64, tpu.core_type = #tpu.core_type<tc>, window_params = [{transform_indices = @transform_0, window_bounds = array<i64: 2, 128>}, {pipeline_mode = #tpu.pipeline_mode<synchronous>, transform_indices = @transform_1, window_bounds = array<i64: 128, 128>}, {transform_indices = @transform_2, window_bounds = array<i64: 2, 128>}]} {
    %c0 = arith.constant 0 : index
    %c0_0 = arith.constant 0 : index
    %0 = vector.load %arg2[%c0, %c0_0] : memref<2x128xf32, #tpu.memory_space<vmem>>, vector<2x128xf32>
    %1 = tpu.iota {dimensions = array<i32: 1>} : vector<2x128xi32>
    %c80_i32 = arith.constant 80 : i32
    %2 = vector.broadcast %c80_i32 : i32 to vector<2x128xi32>
    %3 = arith.cmpi slt, %1, %2 : vector<2x128xi32>
    %c1_i32 = arith.constant 1 : i32
    %4 = vector.broadcast %c1_i32 : i32 to vector<2x128xi32>
    %5 = arith.andi %1, %4 : vector<2x128xi32>
    %c0_i32 = arith.constant 0 : i32
    %6 = vector.broadcast %c0_i32 : i32 to vector<2x128xi32>
    %7 = arith.cmpi eq, %5, %6 : vector<2x128xi32>
    %8 = arith.mulf %0, %0 : vector<2x128xf32>
    %cst = arith.constant 0.000000e+00 : f32
    %9 = vector.broadcast %cst : f32 to vector<2x128xf32>
    %10 = arith.select %3, %8, %9 : vector<2x128xi1>, vector<2x128xf32>
    %cst_1 = arith.constant dense<0.000000e+00> : vector<2xf32>
    %11 = vector.multi_reduction <add>, %10, %cst_1 [1] : vector<2x128xf32> to vector<2xf32>
    %12 = vector.shape_cast %11 : vector<2xf32> to vector<2x1xf32>
    %cst_2 = arith.constant 0.000000e+00 : f32
    %13 = vector.broadcast %cst_2 : f32 to vector<2x128xf32>
    %14 = arith.select %7, %10, %13 : vector<2x128xi1>, vector<2x128xf32>
    %cst_3 = arith.constant dense<0.000000e+00> : vector<2xf32>
    %15 = vector.multi_reduction <add>, %14, %cst_3 [1] : vector<2x128xf32> to vector<2xf32>
    %16 = vector.shape_cast %15 : vector<2xf32> to vector<2x1xf32>
    %17 = arith.subf %12, %16 : vector<2x1xf32>
    %cst_4 = arith.constant 1.000000e-24 : f32
    %18 = vector.broadcast %cst_4 : f32 to vector<2x1xf32>
    %19 = arith.maximumf %16, %18 : vector<2x1xf32>
    %20 = math.rsqrt %19 : vector<2x1xf32>
    %cst_5 = arith.constant 1.000000e-24 : f32
    %21 = vector.broadcast %cst_5 : f32 to vector<2x1xf32>
    %22 = arith.maximumf %17, %21 : vector<2x1xf32>
    %23 = math.rsqrt %22 : vector<2x1xf32>
    %24 = vector.shape_cast %20 : vector<2x1xf32> to vector<2x1xf32>
    %25 = vector.broadcast %24 : vector<2x1xf32> to vector<2x128xf32>
    %26 = vector.shape_cast %23 : vector<2x1xf32> to vector<2x1xf32>
    %27 = vector.broadcast %26 : vector<2x1xf32> to vector<2x128xf32>
    %28 = arith.select %7, %25, %27 : vector<2x128xi1>, vector<2x128xf32>
    %cst_6 = arith.constant 1.11111116 : f32
    %29 = vector.broadcast %cst_6 : f32 to vector<2x128xf32>
    %30 = arith.mulf %28, %29 : vector<2x128xf32>
    %cst_7 = arith.constant 1.000000e+00 : f32
    %31 = vector.broadcast %cst_7 : f32 to vector<2x128xf32>
    %32 = arith.select %3, %30, %31 : vector<2x128xi1>, vector<2x128xf32>
    %33 = tpu.iota {dimensions = array<i32: 0>} : vector<2x128xi32>
    %c2_i32 = arith.constant 2 : i32
    %34 = arith.muli %arg0, %c2_i32 : i32
    %35 = vector.broadcast %34 : i32 to vector<2x128xi32>
    %36 = arith.addi %35, %33 : vector<2x128xi32>
    %c128_i32 = arith.constant 128 : i32
    %37 = vector.broadcast %c128_i32 : i32 to vector<2x128xi32>
    %38 = arith.muli %36, %37 : vector<2x128xi32>
    %39 = arith.addi %38, %1 : vector<2x128xi32>
    %c0_8 = arith.constant 0 : index
    %40 = memref.load %arg1[%c0_8] : memref<1xi32, #tpu.memory_space<smem>>
    %41 = vector.broadcast %40 : i32 to vector<2x128xi32>
    %42 = arith.addi %39, %41 : vector<2x128xi32>
    %c16_i32 = arith.constant 16 : i32
    %43 = vector.broadcast %c16_i32 : i32 to vector<2x128xi32>
    %44 = arith.shrui %42, %43 : vector<2x128xi32>
    %45 = arith.xori %42, %44 : vector<2x128xi32>
    %c2146121005_i32 = arith.constant 2146121005 : i32
    %46 = vector.broadcast %c2146121005_i32 : i32 to vector<2x128xi32>
    %47 = arith.muli %45, %46 : vector<2x128xi32>
    %c15_i32 = arith.constant 15 : i32
    %48 = vector.broadcast %c15_i32 : i32 to vector<2x128xi32>
    %49 = arith.shrui %47, %48 : vector<2x128xi32>
    %50 = arith.xori %47, %49 : vector<2x128xi32>
    %c-2073254261_i32 = arith.constant -2073254261 : i32
    %51 = vector.broadcast %c-2073254261_i32 : i32 to vector<2x128xi32>
    %52 = arith.muli %50, %51 : vector<2x128xi32>
    %c16_i32_9 = arith.constant 16 : i32
    %53 = vector.broadcast %c16_i32_9 : i32 to vector<2x128xi32>
    %54 = arith.shrui %52, %53 : vector<2x128xi32>
    %55 = arith.xori %52, %54 : vector<2x128xi32>
    %c429496729_i32 = arith.constant 429496729 : i32
    %56 = vector.broadcast %c429496729_i32 : i32 to vector<2x128xi32>
    %57 = arith.cmpi uge, %55, %56 : vector<2x128xi32>
    %cst_10 = arith.constant dense<true> : vector<2x128xi1>
    %58 = arith.xori %3, %cst_10 : vector<2x128xi1>
    %59 = arith.ori %57, %58 : vector<2x128xi1>
    %60 = arith.mulf %0, %32 : vector<2x128xf32>
    %cst_11 = arith.constant 0.000000e+00 : f32
    %61 = vector.broadcast %cst_11 : f32 to vector<2x128xf32>
    %62 = arith.select %59, %60, %61 : vector<2x128xi1>, vector<2x128xf32>
    %c0_12 = arith.constant 0 : index
    %c0_13 = arith.constant 0 : index
    %63 = vector.load %arg3[%c0_12, %c0_13] : memref<128x128xf32, #tpu.memory_space<vmem>>, vector<128x128xf32>
    %cst_14 = arith.constant dense<0.000000e+00> : vector<2x128xf32>
    %64 = tpu.matmul %62, %63, %cst_14 {dimension_numbers = #tpu.dot_dimension_numbers<[1], [0], [0], [1], [0, 0, 1, 1], [], []>} : vector<2x128xf32>, vector<128x128xf32>, vector<2x128xf32> -> vector<2x128xf32>
    %c0_15 = arith.constant 0 : index
    %c0_16 = arith.constant 0 : index
    %65 = vector.load %arg4[%c0_15, %c0_16] : memref<2x128xf32, #tpu.memory_space<vmem>>, vector<2x128xf32>
    tpu.vector_store %arg4[%c0_15, %c0_16], %64 {strides = array<i32>} : memref<2x128xf32, #tpu.memory_space<vmem>>, vector<2x128xf32>,
    return
  }
  func.func @transform_0(%arg0: i32, %arg1: memref<1xi32, #tpu.memory_space<smem>>) -> (i32, i32) {
    %c0_i32 = arith.constant 0 : i32
    %c0_i32_0 = arith.constant 0 : i32
    return %arg0, %c0_i32 : i32, i32
  }
  func.func @transform_1(%arg0: i32, %arg1: memref<1xi32, #tpu.memory_space<smem>>) -> (i32, i32) {
    %c0_i32 = arith.constant 0 : i32
    %c0_i32_0 = arith.constant 0 : i32
    %c0_i32_1 = arith.constant 0 : i32
    return %c0_i32, %c0_i32_0 : i32, i32
  }
  func.func @transform_2(%arg0: i32, %arg1: memref<1xi32, #tpu.memory_space<smem>>) -> (i32, i32) {
    %c0_i32 = arith.constant 0 : i32
    %c0_i32_0 = arith.constant 0 : i32
    return %arg0, %c0_i32 : i32, i32
  }
}

</mosaic_0001>

<llo_original>
// kernel: empty_forward.1
$region0: #{empty_forward.1}
  #allocation0 [shape = 'u32[]', space=smem, size = 0x4, offset = 0x4, fixed_abs, tag = 'smem constant byte address 0x4 - core index']
  #allocation1 [shape = 'u32[144,128]{1,0:T(1,128)}', space=vmem, size = 0x12000, scoped, tag = 'internal scratch']
  #allocation2 [shape = 's32[1]{0}', space=sflag, size = 0x4, scoped, tag = 'scoped memory for empty_forward.1']
  #allocation3 [shape = 's32[1]{0:T(128)S(6)}', space=smem, size = 0x200, scoped, tag = 'prefetched SMEM operand 0']
  %s0 = inlined_call_operand.<no memory space> [shape: s32[1], index: 0, kind: input, shape index: {}]
  %s1 = inlined_call_operand.vmem [shape: f32[2,128], index: 1, kind: input, shape index: {}]
  %s2 = inlined_call_operand.vmem [shape: f32[128,128], index: 2, kind: input, shape index: {}]
  %s3 = inlined_call_operand.vmem [shape: f32[2,128], index: 3, kind: output, shape index: {}]
  %s4 = sld [smem:[#allocation0]]
  $region18: #{empty_forward.1} parent=0
    _
  %s6 = ssub.s32 1, %s4
  %s7 = scalar_select 0, %s6, %s4
  %8 = sst [smem:[#allocation3]] %s0
  // Predicated region
  $region2: #{empty_forward.1} parent=0 // pred_check
    _
  $region3: #{empty_forward.1} parent=0 // pred_check_branch
    %10 = sbr.rel (0) target = $region5
  $region4: #{empty_forward.1} parent=0 // pred_region
    _
  $region5: #{empty_forward.1} parent=0 // pred_fallthru
    _
  // Predicated region
  $region6: #{empty_forward.1} parent=0 // pred_check
    _
  $region7: #{empty_forward.1} parent=0 // pred_check_branch
    %12 = sbr.rel (0) target = $region9
  $region8: #{empty_forward.1} parent=0 // pred_region
    _
  $region9: #{empty_forward.1} parent=0 // pred_fallthru
    _
  %v13 = vld [vmem:[%s1] sm:$0x3]
  %v14 = vlaneseq
  %v15 = vand.u32 %v14, 127
  %vm16 = vcmp.lt.s32.totalorder %v15, 80
  %v17 = vand.u32 %v15, 1
  %vm18 = vcmp.eq.s32.totalorder %v17, 0
  %v19 = vmul.f32 %v13, %v13
  %v20 = vsel %vm16, %v19, 0.0
  %vm21 = vcmask 1041408
  %v22 = vsel %vm21, %v20, 0.0
  %23 = vadd.xlane.f32.xlu0 %v22
  %v24 = vpop.xlane.xlu0 %23
  %v25 = vsel %vm18, %v20, 0.0
  %v26 = vsel %vm21, %v25, 0.0
  %27 = vadd.xlane.f32.xlu0 %v26
  %v28 = vpop.xlane.xlu0 %27
  %v29 = vsub.f32 %v24, %v28
  %v30 = vmax.f32 %v28, 1e-24
  %v31 = vrsqrt.pop %v30
  %v32 = vmax.f32 %v29, 1e-24
  %v33 = vrsqrt.pop %v32
  %v34 = vsel %vm18, %v31, %v33
  %v35 = vmul.f32 %v34, 1.1111112
  %v36 = vsel %vm16, %v35, 1.0
  %v37 = vlaneseq
  %v38 = vshrl.u32 %v37, 7
  %s39 = smul.u32 0, 2
  %v40 = vstv %s39
  %v41 = vadd.s32 %v40, %v38
  %v42 = vmul.u32 %v41, 128
  %v43 = vadd.s32 %v42, %v15
  %s44 = sld [smem:[#allocation3]]
  %v45 = vstv %s44
  %v46 = vadd.s32 %v43, %v45
  %v47 = vshrl.u32 %v46, 16
  %v48 = vxor.u32 %v46, %v47
  %v49 = vmul.u32 %v48, 2146121005
  %v50 = vshrl.u32 %v49, 15
  %v51 = vxor.u32 %v49, %v50
  %v52 = vmul.u32 %v51, 2221713035
  %v53 = vshrl.u32 %v52, 16
  %v54 = vxor.u32 %v52, %v53
  %vm55 = vcmp.ge.u32.totalorder %v54, 429496729
  %vm56 = vmxor %vm16, 1
  %vm57 = vmor %vm55, %vm56
  %v58 = vmul.f32 %v13, %v36
  %v59 = vsel %vm57, %v58, 0.0
  %v60 = vld [vmem:[%s2] sm:$0xff]
  %v61 = vld [vmem:[%s2 + $0x8] sm:$0xff]
  %v62 = vld [vmem:[%s2 + $0x10] sm:$0xff]
  %v63 = vld [vmem:[%s2 + $0x18] sm:$0xff]
  %v64 = vld [vmem:[%s2 + $0x20] sm:$0xff]
  %v65 = vld [vmem:[%s2 + $0x28] sm:$0xff]
  %v66 = vld [vmem:[%s2 + $0x30] sm:$0xff]
  %v67 = vld [vmem:[%s2 + $0x38] sm:$0xff]
  %v68 = vld [vmem:[%s2 + $0x40] sm:$0xff]
  %v69 = vld [vmem:[%s2 + $0x48] sm:$0xff]
  %v70 = vld [vmem:[%s2 + $0x50] sm:$0xff]
  %v71 = vld [vmem:[%s2 + $0x58] sm:$0xff]
  %v72 = vld [vmem:[%s2 + $0x60] sm:$0xff]
  %v73 = vld [vmem:[%s2 + $0x68] sm:$0xff]
  %v74 = vld [vmem:[%s2 + $0x70] sm:$0xff]
  %v75 = vld [vmem:[%s2 + $0x78] sm:$0xff]
  %76 = vmatprep.subr.mxu0 0.0
  %77 = vmatpush1.msra.mxu0 %v60
  %78 = vmatprep.subr.mxu0 0.0
  %79 = vmatpush1.msra.mxu0 %v61
  %80 = vmatprep.subr.mxu0 0.0
  %81 = vmatpush1.msra.mxu0 %v62
  %82 = vmatprep.subr.mxu0 0.0
  %83 = vmatpush1.msra.mxu0 %v63
  %84 = vmatprep.subr.mxu0 0.0
  %85 = vmatpush1.msra.mxu0 %v64
  %86 = vmatprep.subr.mxu0 0.0
  %87 = vmatpush1.msra.mxu0 %v65
  %88 = vmatprep.subr.mxu0 0.0
  %89 = vmatpush1.msra.mxu0 %v66
  %90 = vmatprep.subr.mxu0 0.0
  %91 = vmatpush1.msra.mxu0 %v67
  %92 = vmatprep.subr.mxu0 0.0
  %93 = vmatpush1.msra.mxu0 %v68
  %94 = vmatprep.subr.mxu0 0.0
  %95 = vmatpush1.msra.mxu0 %v69
  %96 = vmatprep.subr.mxu0 0.0
  %97 = vmatpush1.msra.mxu0 %v70
  %98 = vmatprep.subr.mxu0 0.0
  %99 = vmatpush1.msra.mxu0 %v71
  %100 = vmatprep.subr.mxu0 0.0
  %101 = vmatpush1.msra.mxu0 %v72
  %102 = vmatprep.subr.mxu0 0.0
  %103 = vmatpush1.msra.mxu0 %v73
  %104 = vmatprep.subr.mxu0 0.0
  %105 = vmatpush1.msra.mxu0 %v74
  %106 = vmatprep.subr.mxu0 0.0
  %107 = vmatpush1.msra.mxu0 %v75
  %108 = vmatprep.subr.mxu0 0.0
  %109 = vmatpush1.msra.mxu0 0.0
  %110 = vmatprep.subr.mxu0 0.0
  %111 = vmatpush1.msra.mxu0 0.0
  %112 = vmatprep.subr.mxu0 0.0
  %113 = vmatpush1.msra.mxu0 0.0
  %114 = vmatprep.subr.mxu0 0.0
  %115 = vmatpush1.msra.mxu0 0.0
  %116 = vmatprep.subr.mxu0 0.0
  %117 = vmatpush1.msra.mxu0 0.0
  %118 = vmatprep.subr.mxu0 0.0
  %119 = vmatpush1.msra.mxu0 0.0
  %120 = vmatprep.subr.mxu0 0.0
  %121 = vmatpush1.msra.mxu0 0.0
  %122 = vmatprep.subr.mxu0 0.0
  %123 = vmatpush1.msra.mxu0 0.0
  %124 = vmatprep.subr.mxu0 0.0
  %125 = vmatpush1.msra.mxu0 0.0
  %126 = vmatprep.subr.mxu0 0.0
  %127 = vmatpush1.msra.mxu0 0.0
  %128 = vmatprep.subr.mxu0 0.0
  %129 = vmatpush1.msra.mxu0 0.0
  %130 = vmatprep.subr.mxu0 0.0
  %131 = vmatpush1.msra.mxu0 0.0
  %132 = vmatprep.subr.mxu0 0.0
  %133 = vmatpush1.msra.mxu0 0.0
  %134 = vmatprep.subr.mxu0 0.0
  %135 = vmatpush1.msra.mxu0 0.0
  %136 = vmatprep.subr.mxu0 0.0
  %137 = vmatpush1.msra.mxu0 0.0
  %138 = vmatprep.subr.mxu0 0.0
  %139 = vmatpush1.msra.mxu0 0.0
  %140 = vmatprep.mubr.f32.mxu0 0.0
  %141 = vmatmul.mubr.f32.gmra.mrb[0].mxu0 %v59
  %v142 = vpop.f32.mrb[0].mxu0
  %v143 = vadd.f32 0.0, %v142
  %v144 = vpop.f32.mrb[0].mxu0
  %145 = vdwg.mxu0
  %146 = vst [vmem:[%s3] sm:$0x3] %v143
  // Predicated region
  $region10: #{empty_forward.1} parent=0 // pred_check
    _
  $region11: #{empty_forward.1} parent=0 // pred_check_branch
    %148 = sbr.rel (0) target = $region13
  $region12: #{empty_forward.1} parent=0 // pred_region
    _
  $region13: #{empty_forward.1} parent=0 // pred_fallthru
    _
  // Predicated region
  $region14: #{empty_forward.1} parent=0 // pred_check
    _
  $region15: #{empty_forward.1} parent=0 // pred_check_branch
    %150 = sbr.rel (0) target = $region17
  $region16: #{empty_forward.1} parent=0 // pred_region
    _
  $region17: #{empty_forward.1} parent=0 // pred_fallthru
    _

</llo_original>
